<compile_context>
chip_gen: v7x
topology: tpu7x:2x2x1
jax: 0.10.0
libtpu: 0.0.40
codegen_flags: <defaults>
</compile_context>

<pallas_src>
import jax
import jax.numpy as jnp
from jax.experimental import pallas as pl
from jax.experimental.pallas import tpu as pltpu

EPS = 1e-12  # F.normalize default eps


def _normed_linear_kernel(x_ref, w_ref, rinv_ref, cinv_ref, o_ref, acc_ref):
    """Grid = (M//tm, N//tn, K//tk); K is the innermost reduction axis."""
    k = pl.program_id(2)

    @pl.when(k == 0)
    def _():
        acc_ref[...] = jnp.zeros_like(acc_ref)

    # Hot loop: pure MXU work, operands in native dtype, f32 accumulation.
    acc_ref[...] += jnp.dot(x_ref[...], w_ref[...],
                            preferred_element_type=jnp.float32)

    @pl.when(k == pl.num_programs(2) - 1)
    def _():
        # Apply the precomputed row/col inverse norms only once, at finalize.
        o_ref[...] = (acc_ref[...] * rinv_ref[...] * cinv_ref[...]).astype(o_ref.dtype)


def _round_up(v, m):
    return (v + m - 1) // m * m


def _vmem_budget_bytes():
    """~75% of this generation's VMEM capacity (96 MiB v5e/v6e, 48 MiB v7x)."""
    cap = None
    try:
        cap = getattr(pltpu.get_tpu_info(), "vmem_capacity_bytes", None)
    except Exception:
        cap = None
    if not cap:
        cap = 64 * 1024 * 1024  # conservative fallback, safe on every generation
    return int(0.75 * int(cap))


def _fit_dim(dim, align, target):
    """Aligned tile <= target, preferring one that divides `dim` (no HBM pad)."""
    aligned = _round_up(dim, align)
    if aligned <= target:
        return aligned
    best = target // align * align
    cand = best
    while cand >= align:
        if dim % cand == 0:
            return cand
        cand -= align
    return best


def _working_set_bytes(tm, tn, tk, xb, wb, ob):
    # double-buffered x/w/out blocks + f32 accumulator + inv_row/inv_col blocks
    # (lane/sublane padded) + slack for compiler-internal scratch.
    return (2 * tm * tk * xb + 2 * tk * tn * wb + 2 * tm * tn * ob
            + tm * tn * 4 + 2 * (tm * 128 + 8 * tn) * 4 + (2 << 20))


def _pick_tiles(m, k, n, x_dtype, w_dtype, o_dtype, budget):
    xb = jnp.dtype(x_dtype).itemsize
    wb = jnp.dtype(w_dtype).itemsize
    ob = jnp.dtype(o_dtype).itemsize
    sub = {4: 8, 2: 16, 1: 32}.get(xb, 8)

    tm = _fit_dim(m, sub, 512)
    tn = _fit_dim(n, 128, 1024)
    tk = _fit_dim(k, 128, 2048)

    # Shrink until the double-buffered working set fits the per-generation
    # VMEM budget.  tk first (reduction dim, not a matmul-output dim).
    while _working_set_bytes(tm, tn, tk, xb, wb, ob) > budget:
        if tk > 512:
            tk = max(128, _round_up(tk // 2, 128))
        elif tn > 256:
            tn = max(128, _round_up(tn // 2, 128))
        elif tm > 8 * sub:
            tm = max(sub, _round_up(tm // 2, sub))
        else:
            break

    # v7x has 2 TensorCores fed by sharding "parallel" grid axes; if the whole
    # problem fits in a single (tm, tn) tile, split one parallel axis in two.
    if _round_up(m, tm) // tm == 1 and _round_up(n, tn) // tn == 1:
        if tm >= 2 * sub:
            tm = _round_up(pl.cdiv(m, 2), sub)
        elif tn >= 2 * 128:
            tn = _round_up(pl.cdiv(n, 2), 128)

    return tm, tn, tk


def normed_linear(x, weight, *, tm=None, tn=None, tk=None):
    """out = normalize_rows(x) @ normalize_cols(weight).

    x: (N, in_features), weight: (in_features, out_features).
    """
    m, d_in = x.shape
    d_in_w, d_out = weight.shape
    assert d_in == d_in_w, (x.shape, weight.shape)

    out_dtype = jnp.result_type(x.dtype, weight.dtype)
    budget = _vmem_budget_bytes()

    atm, atn, atk = _pick_tiles(m, d_in, d_out, x.dtype, weight.dtype,
                                out_dtype, budget)
    tm = atm if tm is None else tm
    tn = atn if tn is None else tn
    tk = atk if tk is None else tk

    # Row / column inverse norms hoisted out of the kernel's K loop.
    # 1/max(||.||, eps) == rsqrt(max(sum_sq, eps^2)).
    inv_row = jax.lax.rsqrt(jnp.maximum(
        jnp.sum(jnp.square(x.astype(jnp.float32)), axis=1, keepdims=True),
        EPS * EPS))                                             # (M, 1) f32
    inv_col = jax.lax.rsqrt(jnp.maximum(
        jnp.sum(jnp.square(weight.astype(jnp.float32)), axis=0, keepdims=True),
        EPS * EPS))                                             # (1, N) f32

    # Zero-pad only what the chosen tiles require (the tile picker prefers
    # divisor tiles so this is usually a no-op for aligned problems).  Zero
    # K-padding contributes 0 to the dot products; padded M rows / N cols are
    # sliced off at the end.
    mp = _round_up(m, tm)
    kp = _round_up(d_in, tk)
    np_ = _round_up(d_out, tn)
    if (mp, kp) != (m, d_in):
        x = jnp.pad(x, ((0, mp - m), (0, kp - d_in)))
    if (kp, np_) != (d_in, d_out):
        weight = jnp.pad(weight, ((0, kp - d_in), (0, np_ - d_out)))
    if mp != m:
        inv_row = jnp.pad(inv_row, ((0, mp - m), (0, 0)))
    if np_ != d_out:
        inv_col = jnp.pad(inv_col, ((0, 0), (0, np_ - d_out)))

    grid = (mp // tm, np_ // tn, kp // tk)

    xb = jnp.dtype(x.dtype).itemsize
    wb = jnp.dtype(weight.dtype).itemsize
    ob = jnp.dtype(out_dtype).itemsize
    est = _working_set_bytes(tm, tn, tk, xb, wb, ob)
    vmem_limit = int(min(budget, max(16 * 1024 * 1024, int(1.5 * est))))

    cost = pl.CostEstimate(
        flops=2 * m * d_in * d_out,
        bytes_accessed=(m * d_in * xb + d_in * d_out * wb + m * d_out * ob
                        + 4 * (m + d_out)),
        transcendentals=0,
    )

    out_padded = pl.pallas_call(
        _normed_linear_kernel,
        out_shape=jax.ShapeDtypeStruct((mp, np_), out_dtype),
        grid_spec=pltpu.PrefetchScalarGridSpec(
            num_scalar_prefetch=0,
            grid=grid,
            in_specs=[
                pl.BlockSpec((tm, tk), lambda i, j, k: (i, k)),
                pl.BlockSpec((tk, tn), lambda i, j, k: (k, j)),
                pl.BlockSpec((tm, 1), lambda i, j, k: (i, 0)),
                pl.BlockSpec((1, tn), lambda i, j, k: (0, j)),
            ],
            out_specs=pl.BlockSpec((tm, tn), lambda i, j, k: (i, j)),
            scratch_shapes=[pltpu.VMEM((tm, tn), jnp.float32)],  # f32 accumulator
        ),
        compiler_params=pltpu.CompilerParams(
            dimension_semantics=("parallel", "parallel", "arbitrary"),
            vmem_limit_bytes=vmem_limit,
        ),
        cost_estimate=cost,
    )(x, weight, inv_row, inv_col)

    return out_padded[:m, :d_out]


def init_weight(key, in_features, out_features):
    """Deterministic equivalent of:
    torch.Tensor(in,out).uniform_(-1,1).renorm_(2,1,1e-5).mul_(1e5)
    renorm_(2, 1, maxnorm) scales each column so its L2 norm is <= maxnorm."""
    w = jax.random.uniform(
        key, (in_features, out_features), jnp.float32, minval=-1.0, maxval=1.0
    )
    col_norm = jnp.sqrt(jnp.sum(w * w, axis=0, keepdims=True))
    maxnorm = 1e-5
    scale = jnp.where(col_norm > maxnorm, maxnorm / (col_norm + 1e-7), 1.0)
    return w * scale * 1e5


def _reference(x, weight):
    xf = x.astype(jnp.float32)
    wf = weight.astype(jnp.float32)
    xn = xf / jnp.maximum(jnp.sqrt(jnp.sum(xf * xf, axis=1, keepdims=True)), EPS)
    wn = wf / jnp.maximum(jnp.sqrt(jnp.sum(wf * wf, axis=0, keepdims=True)), EPS)
    return jnp.dot(xn, wn, precision=jax.lax.Precision.HIGHEST)


if __name__ == "__main__":
    key = jax.random.PRNGKey(0)
    kx, kw, kx2, kw2 = jax.random.split(key, 4)

    # 1) Small demo consistent with the module (single-tile path + padding).
    batch, in_features, out_features = 8, 32, 16
    x = jax.random.normal(kx, (batch, in_features), jnp.float32)
    weight = init_weight(kw, in_features, out_features)

    out = normed_linear(x, weight)
    jax.block_until_ready(out)
    assert out.shape == (batch, out_features)
    ref = _reference(x, weight)
    assert jnp.allclose(out, ref, atol=1e-4, rtol=1e-4)

    # 2) Unaligned, multi-tile shapes exercising the K-reduction accumulator,
    #    M/N parallel tiling and zero-padding (explicit small tiles).
    n2, k2, m2 = 100, 300, 200
    x2 = jax.random.normal(kx2, (n2, k2), jnp.float32)
    w2 = init_weight(kw2, k2, m2)
    out2 = normed_linear(x2, w2, tm=64, tn=128, tk=128)
    jax.block_until_ready(out2)
    assert out2.shape == (n2, m2)
    ref2 = _reference(x2, w2)
    assert jnp.allclose(out2, ref2, atol=1e-4, rtol=1e-4)

    print("KERNEL_OK")
</pallas_src>

<mosaic_0001>
module attributes {stable_mosaic.version = 11 : i64} {
  func.func @_normed_linear_kernel(%arg0: i32, %arg1: i32, %arg2: i32, %arg3: memref<8x128xf32, #tpu.memory_space<vmem>>, %arg4: memref<128x128xf32, #tpu.memory_space<vmem>>, %arg5: memref<8x1xf32, #tpu.memory_space<vmem>>, %arg6: memref<1x128xf32, #tpu.memory_space<vmem>>, %arg7: memref<8x128xf32, #tpu.memory_space<vmem>>, %arg8: memref<8x128xf32, #tpu.memory_space<vmem>>) attributes {dimension_semantics = [#tpu.dimension_semantics<parallel>, #tpu.dimension_semantics<parallel>, #tpu.dimension_semantics<arbitrary>], iteration_bounds = array<i64: 1, 1, 1>, scalar_prefetch = 0 : i64, scratch_operands = 1 : i64, tpu.core_type = #tpu.core_type<tc>, window_params = [{transform_indices = @transform_0, window_bounds = array<i64: 8, 128>}, {transform_indices = @transform_1, window_bounds = array<i64: 128, 128>}, {transform_indices = @transform_2, window_bounds = array<i64: 8, 1>}, {transform_indices = @transform_3, window_bounds = array<i64: 1, 128>}, {transform_indices = @transform_4, window_bounds = array<i64: 8, 128>}]} {
    %c0_i32 = arith.constant 0 : i32
    %0 = arith.cmpi eq, %arg2, %c0_i32 : i32
    %1 = arith.extui %0 : i1 to i32
    %c0_i32_0 = arith.constant 0 : i32
    %2 = arith.cmpi ne, %1, %c0_i32_0 : i32
    scf.if %2 {
      %cst_10 = arith.constant 0.000000e+00 : f32
      %12 = vector.broadcast %cst_10 : f32 to vector<8x128xf32>
      %c0_11 = arith.constant 0 : index
      %c0_12 = arith.constant 0 : index
      %13 = vector.load %arg8[%c0_11, %c0_12] : memref<8x128xf32, #tpu.memory_space<vmem>>, vector<8x128xf32>
      tpu.vector_store %arg8[%c0_11, %c0_12], %12 {strides = array<i32>} : memref<8x128xf32, #tpu.memory_space<vmem>>, vector<8x128xf32>,
    } else {
    }
    %c0 = arith.constant 0 : index
    %c0_1 = arith.constant 0 : index
    %3 = vector.load %arg8[%c0, %c0_1] : memref<8x128xf32, #tpu.memory_space<vmem>>, vector<8x128xf32>
    %c0_2 = arith.constant 0 : index
    %c0_3 = arith.constant 0 : index
    %4 = vector.load %arg3[%c0_2, %c0_3] : memref<8x128xf32, #tpu.memory_space<vmem>>, vector<8x128xf32>
    %c0_4 = arith.constant 0 : index
    %c0_5 = arith.constant 0 : index
    %5 = vector.load %arg4[%c0_4, %c0_5] : memref<128x128xf32, #tpu.memory_space<vmem>>, vector<128x128xf32>
    %cst = arith.constant dense<0.000000e+00> : vector<8x128xf32>
    %6 = tpu.matmul %4, %5, %cst {dimension_numbers = #tpu.dot_dimension_numbers<[1], [0], [0], [1], [0, 0, 1, 1], [], []>} : vector<8x128xf32>, vector<128x128xf32>, vector<8x128xf32> -> vector<8x128xf32>
    %7 = arith.addf %3, %6 : vector<8x128xf32>
    %c0_6 = arith.constant 0 : index
    %c0_7 = arith.constant 0 : index
    %8 = vector.load %arg8[%c0_6, %c0_7] : memref<8x128xf32, #tpu.memory_space<vmem>>, vector<8x128xf32>
    tpu.vector_store %arg8[%c0_6, %c0_7], %7 {strides = array<i32>} : memref<8x128xf32, #tpu.memory_space<vmem>>, vector<8x128xf32>,
    %c0_i32_8 = arith.constant 0 : i32
    %9 = arith.cmpi eq, %arg2, %c0_i32_8 : i32
    %10 = arith.extui %9 : i1 to i32
    %c0_i32_9 = arith.constant 0 : i32
    %11 = arith.cmpi ne, %10, %c0_i32_9 : i32
    scf.if %11 {
      %c0_10 = arith.constant 0 : index
      %c0_11 = arith.constant 0 : index
      %12 = vector.load %arg8[%c0_10, %c0_11] : memref<8x128xf32, #tpu.memory_space<vmem>>, vector<8x128xf32>
      %c0_12 = arith.constant 0 : index
      %c0_13 = arith.constant 0 : index
      %13 = vector.load %arg5[%c0_12, %c0_13] : memref<8x1xf32, #tpu.memory_space<vmem>>, vector<8x1xf32>
      %14 = vector.broadcast %13 : vector<8x1xf32> to vector<8x128xf32>
      %15 = arith.mulf %12, %14 : vector<8x128xf32>
      %c0_14 = arith.constant 0 : index
      %c0_15 = arith.constant 0 : index
      %16 = vector.load %arg6[%c0_14, %c0_15] : memref<1x128xf32, #tpu.memory_space<vmem>>, vector<1x128xf32>
      %17 = vector.broadcast %16 : vector<1x128xf32> to vector<8x128xf32>
      %18 = arith.mulf %15, %17 : vector<8x128xf32>
      %c0_16 = arith.constant 0 : index
      %c0_17 = arith.constant 0 : index
      %19 = vector.load %arg7[%c0_16, %c0_17] : memref<8x128xf32, #tpu.memory_space<vmem>>, vector<8x128xf32>
      tpu.vector_store %arg7[%c0_16, %c0_17], %18 {strides = array<i32>} : memref<8x128xf32, #tpu.memory_space<vmem>>, vector<8x128xf32>,
    } else {
    }
    return
  }
  func.func @transform_0(%arg0: i32, %arg1: i32, %arg2: i32) -> (i32, i32) {
    %c0_i32 = arith.constant 0 : i32
    return %arg0, %arg2 : i32, i32
  }
  func.func @transform_1(%arg0: i32, %arg1: i32, %arg2: i32) -> (i32, i32) {
    %c0_i32 = arith.constant 0 : i32
    return %arg2, %arg1 : i32, i32
  }
  func.func @transform_2(%arg0: i32, %arg1: i32, %arg2: i32) -> (i32, i32) {
    %c0_i32 = arith.constant 0 : i32
    %c0_i32_0 = arith.constant 0 : i32
    return %arg0, %c0_i32 : i32, i32
  }
  func.func @transform_3(%arg0: i32, %arg1: i32, %arg2: i32) -> (i32, i32) {
    %c0_i32 = arith.constant 0 : i32
    %c0_i32_0 = arith.constant 0 : i32
    return %c0_i32, %arg1 : i32, i32
  }
  func.func @transform_4(%arg0: i32, %arg1: i32, %arg2: i32) -> (i32, i32) {
    %c0_i32 = arith.constant 0 : i32
    return %arg0, %arg1 : i32, i32
  }
}

</mosaic_0001>

<llo_original>
// kernel: tpu_custom_call.1
$region0: #{tpu_custom_call.1}
  #allocation0 [shape = 'u32[]', space=smem, size = 0x4, offset = 0x4, fixed_abs, tag = 'smem constant byte address 0x4 - core index']
  #allocation1 [shape = 'u32[144,128]{1,0:T(1,128)}', space=vmem, size = 0x12000, scoped, tag = 'internal scratch']
  #allocation2 [shape = 'f32[8,128]{1,0:T(8,128)}', space=vmem, size = 0x1000, scoped, tag = 'scratch operand']
  %s0 = inlined_call_operand.vmem [shape: f32[8,128], index: 0, kind: input, shape index: {}]
  %s1 = inlined_call_operand.hbm [shape: f32[128,128], index: 1, kind: input, shape index: {}]
  %s2 = inlined_call_operand.vmem [shape: f32[8,1], index: 2, kind: input, shape index: {}]
  %s3 = inlined_call_operand.vmem [shape: f32[1,128], index: 3, kind: input, shape index: {}]
  %s4 = inlined_call_operand.hbm [shape: f32[8,128], index: 4, kind: output, shape index: {}]
  %s5 = sld [smem:[#allocation0]]
  $region38: #{tpu_custom_call.1} parent=0
    _
  %s7 = ssub.s32 1, %s5
  %s8 = scalar_select 0, %s7, %s5
  $region1: #{tpu_custom_call.1} parent=0
    #allocation3 [shape = 'u8[65536]{0}', space=vmem, size = 0x10000, scoped, tag = 'input window, operand 1, single buffered']
    #allocation4 [shape = 's32[1]{0}', space=sflag, size = 0x4, scoped, tag = 'scoped memory for tpu_custom_call.1']
    #allocation5 [shape = 's32[1]{0}', space=sflag, size = 0x4, scoped, tag = 'scoped memory for tpu_custom_call.1']
    #allocation6 [shape = 'u8[4096]{0}', space=vmem, size = 0x1000, scoped, tag = 'output window, operand 0, single buffered']
    %9 = vsyncpa [#allocation4], 0
    %10 = vsyncpa [#allocation5], 0
    // Predicated region
    $region2: #{tpu_custom_call.1} parent=1 // pred_check
      _
    $region3: #{tpu_custom_call.1} parent=1 // pred_check_branch
      %12 = sbr.rel (0) target = $region5
    $region4: #{tpu_custom_call.1} parent=1 // pred_region
      _
    $region5: #{tpu_custom_call.1} parent=1 // pred_fallthru
      _
    // Predicated region
    $region6: #{tpu_custom_call.1} parent=1 // pred_check
      _
    $region7: #{tpu_custom_call.1} parent=1 // pred_check_branch
      %14 = sbr.rel (0) target = $region9
    $region8: #{tpu_custom_call.1} parent=1 // pred_region
      %s16 = ssub.s32 2048, 2048
      %17 = vsyncadd [#allocation4], %s16
      %s18 = sshll.u32 [#allocation3], 4
      %s19 = int_to_ptr.vmem [resolvable:$true] %s18
      %24 = dma.hbm_to_vmem [thread:$0]  %s1, 2048, %s19, [#allocation4], 128, 128, 8
    $region9: #{tpu_custom_call.1} parent=1 // pred_fallthru
      _
    // Predicated region
    $region10: #{tpu_custom_call.1} parent=1 // pred_check
      _
    $region11: #{tpu_custom_call.1} parent=1 // pred_check_branch
      %26 = sbr.rel (0) target = $region13
    $region12: #{tpu_custom_call.1} parent=1 // pred_region
      _
    $region13: #{tpu_custom_call.1} parent=1 // pred_fallthru
      _
    // Predicated region
    $region14: #{tpu_custom_call.1} parent=1 // pred_check
      _
    $region15: #{tpu_custom_call.1} parent=1 // pred_check_branch
      %28 = sbr.rel (0) target = $region17
    $region16: #{tpu_custom_call.1} parent=1 // pred_region
      _
    $region17: #{tpu_custom_call.1} parent=1 // pred_fallthru
      _
    // Predicated region
    $region18: #{tpu_custom_call.1} parent=1 // pred_check
      _
    $region19: #{tpu_custom_call.1} parent=1 // pred_check_branch
      %30 = sbr.rel (0) target = $region21
    $region20: #{tpu_custom_call.1} parent=1 // pred_region
      %31 = dma.done [#allocation4], 2048
    $region21: #{tpu_custom_call.1} parent=1 // pred_fallthru
      _
    %p32 = scmp.eq.s32.totalorder 0, 0
    // Predicated region
    $region22: #{tpu_custom_call.1} parent=1 // pred_check
      %p33 = pneg %p32
    $region23: #{tpu_custom_call.1} parent=1 // pred_check_branch
      %35 = sbr.rel (%p33) target = $region25
    $region24: #{tpu_custom_call.1} parent=1 // pred_region
      %36 = vst [vmem:[#allocation2] sm:$0xff] 0.0
    $region25: #{tpu_custom_call.1} parent=1 // pred_fallthru
      _
    %v37 = vld [vmem:[#allocation2] sm:$0xff]
    %v38 = vld [vmem:[%s0] sm:$0xff]
    %v39 = vld [vmem:[#allocation3] sm:$0xff]
    %v40 = vld [vmem:[#allocation3 + $0x8] sm:$0xff]
    %v41 = vld [vmem:[#allocation3 + $0x10] sm:$0xff]
    %v42 = vld [vmem:[#allocation3 + $0x18] sm:$0xff]
    %v43 = vld [vmem:[#allocation3 + $0x20] sm:$0xff]
    %v44 = vld [vmem:[#allocation3 + $0x28] sm:$0xff]
    %v45 = vld [vmem:[#allocation3 + $0x30] sm:$0xff]
    %v46 = vld [vmem:[#allocation3 + $0x38] sm:$0xff]
    %v47 = vld [vmem:[#allocation3 + $0x40] sm:$0xff]
    %v48 = vld [vmem:[#allocation3 + $0x48] sm:$0xff]
    %v49 = vld [vmem:[#allocation3 + $0x50] sm:$0xff]
    %v50 = vld [vmem:[#allocation3 + $0x58] sm:$0xff]
    %v51 = vld [vmem:[#allocation3 + $0x60] sm:$0xff]
    %v52 = vld [vmem:[#allocation3 + $0x68] sm:$0xff]
    %v53 = vld [vmem:[#allocation3 + $0x70] sm:$0xff]
    %v54 = vld [vmem:[#allocation3 + $0x78] sm:$0xff]
    %55 = vmatprep.subr.mxu0 0.0
    %56 = vmatpush1.msra.mxu0 %v39
    %57 = vmatprep.subr.mxu0 0.0
    %58 = vmatpush1.msra.mxu0 %v40
    %59 = vmatprep.subr.mxu0 0.0
    %60 = vmatpush1.msra.mxu0 %v41
    %61 = vmatprep.subr.mxu0 0.0
    %62 = vmatpush1.msra.mxu0 %v42
    %63 = vmatprep.subr.mxu0 0.0
    %64 = vmatpush1.msra.mxu0 %v43
    %65 = vmatprep.subr.mxu0 0.0
    %66 = vmatpush1.msra.mxu0 %v44
    %67 = vmatprep.subr.mxu0 0.0
    %68 = vmatpush1.msra.mxu0 %v45
    %69 = vmatprep.subr.mxu0 0.0
    %70 = vmatpush1.msra.mxu0 %v46
    %71 = vmatprep.subr.mxu0 0.0
    %72 = vmatpush1.msra.mxu0 %v47
    %73 = vmatprep.subr.mxu0 0.0
    %74 = vmatpush1.msra.mxu0 %v48
    %75 = vmatprep.subr.mxu0 0.0
    %76 = vmatpush1.msra.mxu0 %v49
    %77 = vmatprep.subr.mxu0 0.0
    %78 = vmatpush1.msra.mxu0 %v50
    %79 = vmatprep.subr.mxu0 0.0
    %80 = vmatpush1.msra.mxu0 %v51
    %81 = vmatprep.subr.mxu0 0.0
    %82 = vmatpush1.msra.mxu0 %v52
    %83 = vmatprep.subr.mxu0 0.0
    %84 = vmatpush1.msra.mxu0 %v53
    %85 = vmatprep.subr.mxu0 0.0
    %86 = vmatpush1.msra.mxu0 %v54
    %87 = vmatprep.subr.mxu0 0.0
    %88 = vmatpush1.msra.mxu0 0.0
    %89 = vmatprep.subr.mxu0 0.0
    %90 = vmatpush1.msra.mxu0 0.0
    %91 = vmatprep.subr.mxu0 0.0
    %92 = vmatpush1.msra.mxu0 0.0
    %93 = vmatprep.subr.mxu0 0.0
    %94 = vmatpush1.msra.mxu0 0.0
    %95 = vmatprep.subr.mxu0 0.0
    %96 = vmatpush1.msra.mxu0 0.0
    %97 = vmatprep.subr.mxu0 0.0
    %98 = vmatpush1.msra.mxu0 0.0
    %99 = vmatprep.subr.mxu0 0.0
    %100 = vmatpush1.msra.mxu0 0.0
    %101 = vmatprep.subr.mxu0 0.0
    %102 = vmatpush1.msra.mxu0 0.0
    %103 = vmatprep.subr.mxu0 0.0
    %104 = vmatpush1.msra.mxu0 0.0
    %105 = vmatprep.subr.mxu0 0.0
    %106 = vmatpush1.msra.mxu0 0.0
    %107 = vmatprep.subr.mxu0 0.0
    %108 = vmatpush1.msra.mxu0 0.0
    %109 = vmatprep.subr.mxu0 0.0
    %110 = vmatpush1.msra.mxu0 0.0
    %111 = vmatprep.subr.mxu0 0.0
    %112 = vmatpush1.msra.mxu0 0.0
    %113 = vmatprep.subr.mxu0 0.0
    %114 = vmatpush1.msra.mxu0 0.0
    %115 = vmatprep.subr.mxu0 0.0
    %116 = vmatpush1.msra.mxu0 0.0
    %117 = vmatprep.subr.mxu0 0.0
    %118 = vmatpush1.msra.mxu0 0.0
    %119 = vmatprep.mubr.f32.mxu0 0.0
    %120 = vmatmul.mubr.f32.gmra.mrb[0].mxu0 %v38
    %v121 = vpop.f32.mrb[0].mxu0
    %v122 = vadd.f32 0.0, %v121
    %v123 = vpop.f32.mrb[0].mxu0
    %124 = vdwg.mxu0
    %v125 = vadd.f32 %v37, %v122
    %126 = vst [vmem:[#allocation2] sm:$0xff] %v125
    // Predicated region
    $region26: #{tpu_custom_call.1} parent=1 // pred_check
      %p127 = pneg %p32
    $region27: #{tpu_custom_call.1} parent=1 // pred_check_branch
      %129 = sbr.rel (%p127) target = $region29
    $region28: #{tpu_custom_call.1} parent=1 // pred_region
      %v130 = vld [vmem:[#allocation2] sm:$0xff]
      %v131 = vld [vmem:[%s2] sm:$0xff]
      %133 = vset.pattern.permute.xlu0 0
      %134 = vperm.xlu0 %133, %v131
      %v135 = vpop.permute.xlu0 %134
      %v137 = vmul.f32 %v130, %v135
      %v138 = vld [vmem:[%s3] sm:$0x1]
      %v140 = vlaneseq
      %v141 = vshrl.u32 %v140, 7
      %v142 = vsub.s32 0, %v141
      %v143 = vrot.slane %v138, %v142
      %v145 = vmul.f32 %v137, %v143
      %146 = vst [vmem:[#allocation6] sm:$0xff] %v145
    $region29: #{tpu_custom_call.1} parent=1 // pred_fallthru
      _
    // Predicated region
    $region30: #{tpu_custom_call.1} parent=1 // pred_check
      _
    $region31: #{tpu_custom_call.1} parent=1 // pred_check_branch
      %148 = sbr.rel (0) target = $region33
    $region32: #{tpu_custom_call.1} parent=1 // pred_region
      %s150 = ssub.s32 128, 128
      %151 = vsyncadd [#allocation5], %s150
      %s153 = sshll.u32 [#allocation6], 4
      %s154 = int_to_ptr.vmem [resolvable:$true] %s153
      %156 = dma.vmem_to_hbm [thread:$0]  %s154, 128, %s4, [#allocation5]
    $region33: #{tpu_custom_call.1} parent=1 // pred_fallthru
      _
    // Predicated region
    $region34: #{tpu_custom_call.1} parent=1 // pred_check
      _
    $region35: #{tpu_custom_call.1} parent=1 // pred_check_branch
      %158 = sbr.rel (0) target = $region37
    $region36: #{tpu_custom_call.1} parent=1 // pred_region
      %159 = dma.done [#allocation5], 128
    $region37: #{tpu_custom_call.1} parent=1 // pred_fallthru
      _
    %160 = vsyncpa [#allocation4], 1
    %161 = vsyncpa [#allocation5], 1

</llo_original>
